<compile_context>
chip_gen: v7x
topology: tpu7x:2x2x1
jax: 0.10.0
libtpu: 0.0.40
codegen_flags: <defaults>
</compile_context>

<pallas_src>
import math
import functools

import jax
import jax.numpy as jnp
from jax import lax
from jax.experimental import pallas as pl
from jax.experimental.pallas import tpu as pltpu


_MXU_DTYPE = jnp.bfloat16
_VMEM_LIMIT = 64 * 1024 * 1024


def _row_block(n, target=256):
    """Largest row tile <= target that evenly divides n (falls back to n)."""
    if n <= target:
        return n
    for cand in (target, 128, 64, 32, 16, 8):
        if n % cand == 0:
            return cand
    return n


def _compiler_params(grid_rank):
    return pltpu.CompilerParams(
        dimension_semantics=("parallel",) * grid_rank,
        vmem_limit_bytes=_VMEM_LIMIT)


def _ln(x, g, b):
    mu = jnp.mean(x, axis=-1, keepdims=True)
    var = jnp.mean(jnp.square(x - mu), axis=-1, keepdims=True)
    return (x - mu) * lax.rsqrt(var + 1e-5) * g + b


# ------------------- fused LayerNorm + matmul (QKV projection) -------------------

def _ln_matmul_kernel(x_ref, g_ref, b_ref, w_ref, bias_ref, o_ref):
    x = x_ref[...].astype(jnp.float32)
    z = _ln(x, g_ref[...], b_ref[...])
    acc = jnp.dot(z.astype(w_ref.dtype), w_ref[...],
                  preferred_element_type=jnp.float32) + bias_ref[...]
    o_ref[...] = acc.astype(o_ref.dtype)


def ln_matmul(x2d, gamma, beta, w, bias, out_dtype=_MXU_DTYPE):
    n, d = x2d.shape
    dout = w.shape[1]
    br = _row_block(n)
    return pl.pallas_call(
        _ln_matmul_kernel,
        out_shape=jax.ShapeDtypeStruct((n, dout), out_dtype),
        grid=(n // br,),
        in_specs=[
            pl.BlockSpec((br, d), lambda i: (i, 0)),
            pl.BlockSpec((1, d), lambda i: (0, 0)),
            pl.BlockSpec((1, d), lambda i: (0, 0)),
            pl.BlockSpec((d, dout), lambda i: (0, 0)),
            pl.BlockSpec((1, dout), lambda i: (0, 0)),
        ],
        out_specs=pl.BlockSpec((br, dout), lambda i: (i, 0)),
        compiler_params=_compiler_params(1),
    )(x2d, gamma.reshape(1, d), beta.reshape(1, d), w, bias.reshape(1, dout))


# ----------------------- output projection + residual add ------------------------

def _proj_residual_kernel(a_ref, w_ref, b_ref, res_ref, o_ref):
    acc = jnp.dot(a_ref[...], w_ref[...], preferred_element_type=jnp.float32)
    o_ref[...] = (acc + b_ref[...] + res_ref[...].astype(jnp.float32)).astype(o_ref.dtype)


def proj_residual(a2d, w, bias, res2d):
    n, din = a2d.shape
    dout = w.shape[1]
    br = _row_block(n)
    return pl.pallas_call(
        _proj_residual_kernel,
        out_shape=jax.ShapeDtypeStruct((n, dout), jnp.float32),
        grid=(n // br,),
        in_specs=[
            pl.BlockSpec((br, din), lambda i: (i, 0)),
            pl.BlockSpec((din, dout), lambda i: (0, 0)),
            pl.BlockSpec((1, dout), lambda i: (0, 0)),
            pl.BlockSpec((br, dout), lambda i: (i, 0)),
        ],
        out_specs=pl.BlockSpec((br, dout), lambda i: (i, 0)),
        compiler_params=_compiler_params(1),
    )(a2d, w, bias.reshape(1, dout), res2d)


# --------------------------- LayerNorm + FFN + residual --------------------------

def _ln_ffn_kernel(x_ref, g_ref, b_ref, w1_ref, b1_ref, w2_ref, b2_ref, o_ref):
    x = x_ref[...].astype(jnp.float32)
    z = _ln(x, g_ref[...], b_ref[...])
    h = jnp.dot(z.astype(w1_ref.dtype), w1_ref[...],
                preferred_element_type=jnp.float32) + b1_ref[...]
    h = jnp.maximum(h, 0.0)                       # ReLU, fp32
    y = jnp.dot(h.astype(w2_ref.dtype), w2_ref[...],
                preferred_element_type=jnp.float32) + b2_ref[...]
    o_ref[...] = (x + y).astype(o_ref.dtype)      # residual add fused


def ln_ffn(x2d, gamma, beta, w1, b1, w2, b2):
    n, d = x2d.shape
    dff = w1.shape[1]
    br = _row_block(n)
    return pl.pallas_call(
        _ln_ffn_kernel,
        out_shape=jax.ShapeDtypeStruct((n, d), jnp.float32),
        grid=(n // br,),
        in_specs=[
            pl.BlockSpec((br, d), lambda i: (i, 0)),
            pl.BlockSpec((1, d), lambda i: (0, 0)),
            pl.BlockSpec((1, d), lambda i: (0, 0)),
            pl.BlockSpec((d, dff), lambda i: (0, 0)),
            pl.BlockSpec((1, dff), lambda i: (0, 0)),
            pl.BlockSpec((dff, d), lambda i: (0, 0)),
            pl.BlockSpec((1, d), lambda i: (0, 0)),
        ],
        out_specs=pl.BlockSpec((br, d), lambda i: (i, 0)),
        compiler_params=_compiler_params(1),
    )(x2d, gamma.reshape(1, d), beta.reshape(1, d),
      w1, b1.reshape(1, dff), w2, b2.reshape(1, d))


# --------------------------------- LayerNorm -------------------------------------

def _layernorm_kernel(x_ref, g_ref, b_ref, o_ref):
    x = x_ref[...].astype(jnp.float32)
    o_ref[...] = _ln(x, g_ref[...], b_ref[...]).astype(o_ref.dtype)


def layernorm(x2d, gamma, beta):
    n, d = x2d.shape
    br = _row_block(n)
    return pl.pallas_call(
        _layernorm_kernel,
        out_shape=jax.ShapeDtypeStruct((n, d), jnp.float32),
        grid=(n // br,),
        in_specs=[
            pl.BlockSpec((br, d), lambda i: (i, 0)),
            pl.BlockSpec((1, d), lambda i: (0, 0)),
            pl.BlockSpec((1, d), lambda i: (0, 0)),
        ],
        out_specs=pl.BlockSpec((br, d), lambda i: (i, 0)),
        compiler_params=_compiler_params(1),
    )(x2d, gamma.reshape(1, d), beta.reshape(1, d))


# --------------------------- relative multi-head attention -----------------------

def _rel_shift(m, lq, lk):
    """m: [lq, R] fp32 with R >= lq + lk.  Returns bd[i, j] = m[i, lq + j - i].

    Per-row rotate-right by the row index, done as a barrel shifter:
    log2(lq) static lane rolls + selects (pure copy/VPU work, no gather).
    """
    rows = lax.broadcasted_iota(jnp.int32, m.shape, 0)
    cur = m
    shift = 1
    while shift < lq:
        rolled = jnp.concatenate([cur[:, -shift:], cur[:, :-shift]], axis=1)
        cur = jnp.where((rows & shift) != 0, rolled, cur)
        shift *= 2
    return cur[:, lq:lq + lk]


def _rel_attn_kernel(qkv_ref, pos_w_ref, u_ref, pos_b_ref, mask_ref, o_ref, *,
                     lq, lk, mem_len, heads, d_k):
    hd = heads * d_k
    mask = mask_ref[...]                                   # [lq, lk] additive (0 / -1e30)
    outs = []
    for h in range(heads):                                 # static unroll over heads
        q_h = qkv_ref[0, mem_len:, h * d_k:(h + 1) * d_k]               # [lq, dk] bf16
        k_h = qkv_ref[0, :, hd + h * d_k:hd + (h + 1) * d_k]            # [lk, dk]
        v_h = qkv_ref[0, :, 2 * hd + h * d_k:2 * hd + (h + 1) * d_k]    # [lk, dk]
        u_h = u_ref[h:h + 1, :]                                         # [1, dk]
        pe_h = pos_w_ref[h * d_k:(h + 1) * d_k, :]                      # [dk, R]

        # A term: q @ k^T ; C term: u @ k^T  (1/sqrt(d_k) already folded into q / u)
        ac = lax.dot_general(q_h, k_h, (((1,), (1,)), ((), ())),
                             preferred_element_type=jnp.float32)        # [lq, lk]
        c = lax.dot_general(u_h, k_h, (((1,), (1,)), ((), ())),
                            preferred_element_type=jnp.float32)         # [1, lk]
        # B + D terms: MXU matmul against the un-shifted relative table, then shift.
        b_full = jnp.dot(q_h, pe_h, preferred_element_type=jnp.float32)  # [lq, R]
        bd = _rel_shift(b_full + pos_b_ref[h:h + 1, :], lq, lk)          # [lq, lk]

        scores = ac + c + bd + mask                        # fp32
        smax = jnp.max(scores, axis=-1, keepdims=True)
        p = jnp.exp(scores - smax)
        denom = jnp.sum(p, axis=-1, keepdims=True)
        attn = p * pl.reciprocal(denom, approx=True)
        outs.append(jnp.dot(attn.astype(v_h.dtype), v_h,
                            preferred_element_type=jnp.float32))
    # one lane-dense store of all heads
    o_ref[0] = jnp.concatenate(outs, axis=-1).astype(o_ref.dtype)


def rel_attention(qkv, pos_w, u, pos_b, mask_bias, *, lq, mem_len, heads, d_k):
    b, lk, _ = qkv.shape
    hd = heads * d_k
    r = pos_w.shape[1]
    assert r >= lq + lk
    kernel = functools.partial(_rel_attn_kernel, lq=lq, lk=lk, mem_len=mem_len,
                               heads=heads, d_k=d_k)
    return pl.pallas_call(
        kernel,
        out_shape=jax.ShapeDtypeStruct((b, lq, hd), _MXU_DTYPE),
        grid=(b,),
        in_specs=[
            pl.BlockSpec((1, lk, 3 * hd), lambda i: (i, 0, 0)),
            pl.BlockSpec((hd, r), lambda i: (0, 0)),          # stays VMEM-resident
            pl.BlockSpec((heads, d_k), lambda i: (0, 0)),
            pl.BlockSpec((heads, r), lambda i: (0, 0)),
            pl.BlockSpec((lq, lk), lambda i: (0, 0)),
        ],
        out_specs=pl.BlockSpec((1, lq, hd), lambda i: (i, 0, 0)),
        compiler_params=_compiler_params(1),
    )(qkv, pos_w, u, pos_b, mask_bias)


# ------------------------------------ model glue ---------------------------------

def xl_layer(p, x, mem, mask_bias, heads, d_k):
    b, s, d = x.shape
    hd = heads * d_k
    scale = 1.0 / math.sqrt(d_k)

    # tiny host-side parameter prep (scale folded into q / u / pos_bias; bf16 casts)
    wqkv = jnp.concatenate([p["wq"] * scale, p["wk"], p["wv"]], axis=1).astype(_MXU_DTYPE)
    bqkv = jnp.concatenate([jnp.zeros((2 * hd,), jnp.float32), p["bv"]])
    pos_w = jnp.transpose(p["pos_emb"], (1, 2, 0)).reshape(hd, -1).astype(_MXU_DTYPE)
    pos_b = (jnp.transpose(p["pos_bias"], (1, 0)) * scale).astype(jnp.float32)
    u = (p["u"] * scale).astype(_MXU_DTYPE)

    m_cat = jnp.concatenate([mem, x], axis=1) if mem is not None else x
    lk = m_cat.shape[1]

    # fused LN + QKV projection over [mem ; x]; q is read from the last s rows in-kernel
    qkv = ln_matmul(m_cat.reshape(-1, d), p["ln_attn_g"], p["ln_attn_b"],
                    wqkv, bqkv).reshape(b, lk, 3 * hd)
    attn = rel_attention(qkv, pos_w, u, pos_b, mask_bias,
                         lq=s, mem_len=lk - s, heads=heads, d_k=d_k)     # [b, s, hd]
    x = proj_residual(attn.reshape(-1, hd), p["wo"].astype(_MXU_DTYPE),
                      p["bo"], x.reshape(-1, d)).reshape(b, s, d)        # dropout == id
    x = ln_ffn(x.reshape(-1, d), p["ln_ff_g"], p["ln_ff_b"],
               p["w1"].astype(_MXU_DTYPE), p["b1"],
               p["w2"].astype(_MXU_DTYPE), p["b2"]).reshape(b, s, d)     # dropout == id
    return x


def transformer_xl(params, x, mems, mask):
    # x: [S, B, D]; mems: list of [M, B, D]; mask: [S, Lk, 1] with 1 = attend.
    heads, d_k = params["heads"], params["d_k"]
    mask_bias = jnp.where(mask[:, :, 0] > 0, 0.0, -1e30).astype(jnp.float32)
    xb = jnp.transpose(x, (1, 0, 2))                       # batch-major internally
    mems_b = [jnp.transpose(m, (1, 0, 2)) for m in mems] if mems else None
    new_mem = []
    for i, p in enumerate(params["layers"]):
        new_mem.append(jnp.transpose(xb, (1, 0, 2)))       # layer input (detach), seq-major
        m = mems_b[i] if mems_b else None
        xb = xl_layer(p, xb, m, mask_bias, heads, d_k)
    b, s, d = xb.shape
    out = layernorm(xb.reshape(-1, d),
                    params["final_g"], params["final_b"]).reshape(b, s, d)
    return jnp.transpose(out, (1, 0, 2)), new_mem


def init_params(key, num_layers, d_model, heads, d_k, d_ff, rel_len):
    def nrm(k, shape, scale=0.05):
        return scale * jax.random.normal(k, shape, jnp.float32)

    layers = []
    for _ in range(num_layers):
        key, *ks = jax.random.split(key, 20)
        layers.append(dict(
            ln_attn_g=1.0 + nrm(ks[0], (d_model,)),
            ln_attn_b=nrm(ks[1], (d_model,)),
            ln_ff_g=1.0 + nrm(ks[2], (d_model,)),
            ln_ff_b=nrm(ks[3], (d_model,)),
            wq=nrm(ks[4], (d_model, heads * d_k)),        # no bias (bias=False)
            wk=nrm(ks[5], (d_model, heads * d_k)),        # no bias (bias=False)
            wv=nrm(ks[6], (d_model, heads * d_k)),
            bv=nrm(ks[7], (heads * d_k,)),
            wo=nrm(ks[8], (heads * d_k, d_model)),
            bo=nrm(ks[9], (d_model,)),
            pos_emb=nrm(ks[10], (rel_len, heads, d_k)),   # key_pos_embeddings[P-Lk : P+Lq]
            pos_bias=nrm(ks[11], (rel_len, heads)),       # key_pos_bias[P-Lk : P+Lq]
            u=nrm(ks[12], (heads, d_k)),                  # query_pos_bias
            w1=nrm(ks[13], (d_model, d_ff)),
            b1=nrm(ks[14], (d_ff,)),
            w2=nrm(ks[15], (d_ff, d_model)),
            b2=nrm(ks[16], (d_model,)),
        ))
    key, k1, k2 = jax.random.split(key, 3)
    return dict(layers=layers,
                final_g=1.0 + nrm(k1, (d_model,)),
                final_b=nrm(k2, (d_model,)),
                heads=heads, d_k=d_k)


# ------------------------------ pure-JAX reference --------------------------------

def _ref_ln(x, g, b):
    mu = x.mean(-1, keepdims=True)
    var = ((x - mu) ** 2).mean(-1, keepdims=True)
    return (x - mu) / jnp.sqrt(var + 1e-5) * g + b


def _ref_shift_right(x):
    zero = jnp.zeros((x.shape[0], 1) + x.shape[2:], x.dtype)
    xp = jnp.concatenate([x, zero], axis=1)
    xp = xp.reshape((x.shape[1] + 1, x.shape[0]) + x.shape[2:])
    return xp[:-1].reshape(x.shape)


def _ref_mha(p, z, m_z, mask2d, heads, d_k):
    Lq, B, D = z.shape
    Lk = m_z.shape[0]
    q = (z @ p["wq"]).reshape(Lq, B, heads, d_k)
    k = (m_z @ p["wk"]).reshape(Lk, B, heads, d_k)
    v = (m_z @ p["wv"] + p["bv"]).reshape(Lk, B, heads, d_k)
    ac = jnp.einsum("ibhd,jbhd->ijbh", q + p["u"][None, None], k)
    bmat = jnp.einsum("ibhd,jhd->ijbh", q, p["pos_emb"])
    d = p["pos_bias"][None, :, None, :]
    bd = _ref_shift_right(bmat + d)[:, -Lk:]
    scores = (ac + bd) / math.sqrt(d_k)
    scores = jnp.where(mask2d[:, :, None, None] > 0, scores, -1e30)
    attn = jax.nn.softmax(scores, axis=1)
    o = jnp.einsum("ijbh,jbhd->ibhd", attn, v).reshape(Lq, B, D)
    return o @ p["wo"] + p["bo"]


def _ref_layer(p, x, mem, mask2d, heads, d_k):
    z = _ref_ln(x, p["ln_attn_g"], p["ln_attn_b"])
    if mem is not None:
        mn = _ref_ln(mem, p["ln_attn_g"], p["ln_attn_b"])
        m_z = jnp.concatenate([mn, z], axis=0)
    else:
        m_z = z
    x = x + _ref_mha(p, z, m_z, mask2d, heads, d_k)
    z2 = _ref_ln(x, p["ln_ff_g"], p["ln_ff_b"])
    ff = jnp.maximum(z2 @ p["w1"] + p["b1"], 0.0) @ p["w2"] + p["b2"]
    return x + ff


def _ref_forward(params, x, mems, mask):
    mask2d = mask[:, :, 0]
    for i, p in enumerate(params["layers"]):
        m = mems[i] if mems else None
        x = _ref_layer(p, x, m, mask2d, params["heads"], params["d_k"])
    return _ref_ln(x, params["final_g"], params["final_b"])


# ----------------------------------- main ------------------------------------------

if __name__ == "__main__":
    S, B, D = 8, 2, 32          # seq, batch, d_model
    H, DK, DFF = 4, 8, 64       # heads, d_k, d_ff
    MEM = 8                     # memory length
    NUM_LAYERS = 2
    LK = MEM + S

    key = jax.random.PRNGKey(0)
    key, kx, km1, km2 = jax.random.split(key, 4)
    params = init_params(key, NUM_LAYERS, D, H, DK, DFF, rel_len=S + LK)

    x = jax.random.normal(kx, (S, B, D), jnp.float32)
    mems = [jax.random.normal(km1, (MEM, B, D), jnp.float32),
            jax.random.normal(km2, (MEM, B, D), jnp.float32)]

    # mask: attend to all memory + causal over current tokens; shape [S, LK, 1]
    mask_x = jnp.tril(jnp.ones((S, S), jnp.float32))
    mask_mem = jnp.ones((S, MEM), jnp.float32)
    mask = jnp.concatenate([mask_mem, mask_x], axis=1)[:, :, None]

    out, new_mem = transformer_xl(params, x, mems, mask)
    out = jax.block_until_ready(out)

    ref = _ref_forward(params, x, mems, mask)
    err = float(jnp.max(jnp.abs(out - ref)))
    # bf16 MXU inputs with fp32 accumulation -> slightly looser tolerance than pure fp32
    assert err < 2e-2, f"max abs error {err}"
    assert len(new_mem) == NUM_LAYERS and new_mem[0].shape == x.shape

    print("KERNEL_OK")
</pallas_src>

<mosaic_0001>
module attributes {stable_mosaic.version = 11 : i64} {
  func.func @_ln_matmul_kernel(%arg0: i32, %arg1: memref<32x32xf32, #tpu.memory_space<vmem>>, %arg2: memref<1x32xf32, #tpu.memory_space<vmem>>, %arg3: memref<1x32xf32, #tpu.memory_space<vmem>>, %arg4: memref<32x96xbf16, #tpu.memory_space<vmem>>, %arg5: memref<1x96xf32, #tpu.memory_space<vmem>>, %arg6: memref<32x96xbf16, #tpu.memory_space<vmem>>) attributes {dimension_semantics = [#tpu.dimension_semantics<parallel>], iteration_bounds = array<i64: 1>, scalar_prefetch = 0 : i64, scratch_operands = 0 : i64, tpu.core_type = #tpu.core_type<tc>, window_params = [{transform_indices = @transform_0, window_bounds = array<i64: 32, 32>}, {pipeline_mode = #tpu.pipeline_mode<synchronous>, transform_indices = @transform_1, window_bounds = array<i64: 1, 32>}, {pipeline_mode = #tpu.pipeline_mode<synchronous>, transform_indices = @transform_2, window_bounds = array<i64: 1, 32>}, {pipeline_mode = #tpu.pipeline_mode<synchronous>, transform_indices = @transform_3, window_bounds = array<i64: 32, 96>}, {pipeline_mode = #tpu.pipeline_mode<synchronous>, transform_indices = @transform_4, window_bounds = array<i64: 1, 96>}, {transform_indices = @transform_5, window_bounds = array<i64: 32, 96>}]} {
    %c0 = arith.constant 0 : index
    %c0_0 = arith.constant 0 : index
    %0 = vector.load %arg1[%c0, %c0_0] : memref<32x32xf32, #tpu.memory_space<vmem>>, vector<32x32xf32>
    %c0_1 = arith.constant 0 : index
    %c0_2 = arith.constant 0 : index
    %1 = vector.load %arg2[%c0_1, %c0_2] : memref<1x32xf32, #tpu.memory_space<vmem>>, vector<1x32xf32>
    %c0_3 = arith.constant 0 : index
    %c0_4 = arith.constant 0 : index
    %2 = vector.load %arg3[%c0_3, %c0_4] : memref<1x32xf32, #tpu.memory_space<vmem>>, vector<1x32xf32>
    %cst = arith.constant dense<0.000000e+00> : vector<32xf32>
    %3 = vector.multi_reduction <add>, %0, %cst [1] : vector<32x32xf32> to vector<32xf32>
    %4 = vector.shape_cast %3 : vector<32xf32> to vector<32x1xf32>
    %cst_5 = arith.constant 3.200000e+01 : f32
    %5 = vector.broadcast %cst_5 : f32 to vector<32x1xf32>
    %6 = arith.divf %4, %5 : vector<32x1xf32>
    %7 = vector.broadcast %6 : vector<32x1xf32> to vector<32x32xf32>
    %8 = arith.subf %0, %7 : vector<32x32xf32>
    %9 = arith.mulf %8, %8 : vector<32x32xf32>
    %cst_6 = arith.constant dense<0.000000e+00> : vector<32xf32>
    %10 = vector.multi_reduction <add>, %9, %cst_6 [1] : vector<32x32xf32> to vector<32xf32>
    %11 = vector.shape_cast %10 : vector<32xf32> to vector<32x1xf32>
    %cst_7 = arith.constant 3.200000e+01 : f32
    %12 = vector.broadcast %cst_7 : f32 to vector<32x1xf32>
    %13 = arith.divf %11, %12 : vector<32x1xf32>
    %14 = vector.broadcast %6 : vector<32x1xf32> to vector<32x32xf32>
    %15 = arith.subf %0, %14 : vector<32x32xf32>
    %cst_8 = arith.constant 9.99999974E-6 : f32
    %16 = vector.broadcast %cst_8 : f32 to vector<32x1xf32>
    %17 = arith.addf %13, %16 : vector<32x1xf32>
    %18 = math.rsqrt %17 : vector<32x1xf32>
    %19 = vector.broadcast %18 : vector<32x1xf32> to vector<32x32xf32>
    %20 = arith.mulf %15, %19 : vector<32x32xf32>
    %21 = vector.broadcast %1 : vector<1x32xf32> to vector<32x32xf32>
    %22 = arith.mulf %20, %21 : vector<32x32xf32>
    %23 = vector.broadcast %2 : vector<1x32xf32> to vector<32x32xf32>
    %24 = arith.addf %22, %23 : vector<32x32xf32>
    %25 = arith.truncf %24 : vector<32x32xf32> to vector<32x32xbf16>
    %c0_9 = arith.constant 0 : index
    %c0_10 = arith.constant 0 : index
    %26 = vector.load %arg4[%c0_9, %c0_10] : memref<32x96xbf16, #tpu.memory_space<vmem>>, vector<32x96xbf16>
    %cst_11 = arith.constant dense<0.000000e+00> : vector<32x96xf32>
    %27 = tpu.matmul %25, %26, %cst_11 {dimension_numbers = #tpu.dot_dimension_numbers<[1], [0], [0], [1], [0, 0, 1, 1], [], []>} : vector<32x32xbf16>, vector<32x96xbf16>, vector<32x96xf32> -> vector<32x96xf32>
    %c0_12 = arith.constant 0 : index
    %c0_13 = arith.constant 0 : index
    %28 = vector.load %arg5[%c0_12, %c0_13] : memref<1x96xf32, #tpu.memory_space<vmem>>, vector<1x96xf32>
    %29 = vector.broadcast %28 : vector<1x96xf32> to vector<32x96xf32>
    %30 = arith.addf %27, %29 : vector<32x96xf32>
    %31 = arith.truncf %30 : vector<32x96xf32> to vector<32x96xbf16>
    %c0_14 = arith.constant 0 : index
    %c0_15 = arith.constant 0 : index
    %32 = vector.load %arg6[%c0_14, %c0_15] : memref<32x96xbf16, #tpu.memory_space<vmem>>, vector<32x96xbf16>
    tpu.vector_store %arg6[%c0_14, %c0_15], %31 {strides = array<i32>} : memref<32x96xbf16, #tpu.memory_space<vmem>>, vector<32x96xbf16>,
    return
  }
  func.func @transform_0(%arg0: i32) -> (i32, i32) {
    %c0_i32 = arith.constant 0 : i32
    %c0_i32_0 = arith.constant 0 : i32
    return %arg0, %c0_i32 : i32, i32
  }
  func.func @transform_1(%arg0: i32) -> (i32, i32) {
    %c0_i32 = arith.constant 0 : i32
    %c0_i32_0 = arith.constant 0 : i32
    %c0_i32_1 = arith.constant 0 : i32
    return %c0_i32, %c0_i32_0 : i32, i32
  }
  func.func @transform_2(%arg0: i32) -> (i32, i32) {
    %c0_i32 = arith.constant 0 : i32
    %c0_i32_0 = arith.constant 0 : i32
    %c0_i32_1 = arith.constant 0 : i32
    return %c0_i32, %c0_i32_0 : i32, i32
  }
  func.func @transform_3(%arg0: i32) -> (i32, i32) {
    %c0_i32 = arith.constant 0 : i32
    %c0_i32_0 = arith.constant 0 : i32
    %c0_i32_1 = arith.constant 0 : i32
    return %c0_i32, %c0_i32_0 : i32, i32
  }
  func.func @transform_4(%arg0: i32) -> (i32, i32) {
    %c0_i32 = arith.constant 0 : i32
    %c0_i32_0 = arith.constant 0 : i32
    %c0_i32_1 = arith.constant 0 : i32
    return %c0_i32, %c0_i32_0 : i32, i32
  }
  func.func @transform_5(%arg0: i32) -> (i32, i32) {
    %c0_i32 = arith.constant 0 : i32
    %c0_i32_0 = arith.constant 0 : i32
    return %arg0, %c0_i32 : i32, i32
  }
}

</mosaic_0001>

<llo_original>
// kernel: tpu_custom_call.1
$region0: #{tpu_custom_call.1}
  #allocation0 [shape = 'u32[]', space=smem, size = 0x4, offset = 0x4, fixed_abs, tag = 'smem constant byte address 0x4 - core index']
  #allocation1 [shape = 'u32[144,128]{1,0:T(1,128)}', space=vmem, size = 0x12000, scoped, tag = 'internal scratch']
  %s0 = inlined_call_operand.hbm [shape: f32[32,32], index: 0, kind: input, shape index: {}]
  %s1 = inlined_call_operand.hbm [shape: f32[1,32], index: 1, kind: input, shape index: {}]
  %s2 = inlined_call_operand.hbm [shape: f32[1,32], index: 2, kind: input, shape index: {}]
  %s3 = inlined_call_operand.hbm [shape: bf16[32,96], index: 3, kind: input, shape index: {}]
  %s4 = inlined_call_operand.hbm [shape: f32[1,96], index: 4, kind: input, shape index: {}]
  %s5 = inlined_call_operand.hbm [shape: bf16[32,96], index: 5, kind: output, shape index: {}]
  %s6 = sld [smem:[#allocation0]]
  $region50: #{tpu_custom_call.1} parent=0
    _
  %s8 = ssub.s32 1, %s6
  %s9 = scalar_select 0, %s8, %s6
  $region1: #{tpu_custom_call.1} parent=0
    #allocation2 [shape = 'u8[16384]{0}', space=vmem, size = 0x4000, scoped, tag = 'input window, operand 0, single buffered']
    #allocation3 [shape = 's32[1]{0}', space=sflag, size = 0x4, scoped, tag = 'scoped memory for tpu_custom_call.1']
    #allocation4 [shape = 's32[1]{0}', space=sflag, size = 0x4, scoped, tag = 'scoped memory for tpu_custom_call.1']
    #allocation5 [shape = 'u8[512]{0}', space=vmem, size = 0x400, scoped, tag = 'input window, operand 1, single buffered']
    #allocation6 [shape = 's32[1]{0}', space=sflag, size = 0x4, scoped, tag = 'scoped memory for tpu_custom_call.1']
    #allocation7 [shape = 'u8[512]{0}', space=vmem, size = 0x400, scoped, tag = 'input window, operand 2, single buffered']
    #allocation8 [shape = 'u8[8192]{0}', space=vmem, size = 0x2000, scoped, tag = 'input window, operand 3, single buffered']
    #allocation9 [shape = 's32[1]{0}', space=sflag, size = 0x4, scoped, tag = 'scoped memory for tpu_custom_call.1']
    #allocation10 [shape = 'u8[512]{0}', space=vmem, size = 0x400, scoped, tag = 'input window, operand 4, single buffered']
    #allocation11 [shape = 'u8[8192]{0}', space=vmem, size = 0x2000, scoped, tag = 'output window, operand 0, single buffered']
    %10 = vsyncpa [#allocation3], 0
    %11 = vsyncpa [#allocation6], 0
    %12 = vsyncpa [#allocation9], 0
    %13 = vsyncpa [#allocation4], 0
    // Predicated region
    $region2: #{tpu_custom_call.1} parent=1 // pred_check
      _
    $region3: #{tpu_custom_call.1} parent=1 // pred_check_branch
      %15 = sbr.rel (0) target = $region5
    $region4: #{tpu_custom_call.1} parent=1 // pred_region
      %s17 = ssub.s32 512, 512
      %18 = vsyncadd [#allocation3], %s17
      %s19 = sshll.u32 [#allocation2], 4
      %s20 = int_to_ptr.vmem [resolvable:$true] %s19
      %25 = dma.hbm_to_vmem [thread:$0]  %s0, 512, %s20, [#allocation3], 128, 128, 8
    $region5: #{tpu_custom_call.1} parent=1 // pred_fallthru
      _
    // Predicated region
    $region6: #{tpu_custom_call.1} parent=1 // pred_check
      _
    $region7: #{tpu_custom_call.1} parent=1 // pred_check_branch
      %27 = sbr.rel (0) target = $region9
    $region8: #{tpu_custom_call.1} parent=1 // pred_region
      %s29 = ssub.s32 16, 16
      %30 = vsyncadd [#allocation6], %s29
      %s32 = sshll.u32 [#allocation5], 4
      %s33 = int_to_ptr.vmem [resolvable:$true] %s32
      %35 = dma.hbm_to_vmem [thread:$0]  %s1, 16, %s33, [#allocation6]
    $region9: #{tpu_custom_call.1} parent=1 // pred_fallthru
      _
    // Predicated region
    $region10: #{tpu_custom_call.1} parent=1 // pred_check
      _
    $region11: #{tpu_custom_call.1} parent=1 // pred_check_branch
      %37 = sbr.rel (0) target = $region13
    $region12: #{tpu_custom_call.1} parent=1 // pred_region
      %s39 = ssub.s32 16, 16
      %40 = vsyncadd [#allocation6], %s39
      %s42 = sshll.u32 [#allocation7], 4
      %s43 = int_to_ptr.vmem [resolvable:$true] %s42
      %45 = dma.hbm_to_vmem [thread:$0]  %s2, 16, %s43, [#allocation6]
    $region13: #{tpu_custom_call.1} parent=1 // pred_fallthru
      _
    // Predicated region
    $region14: #{tpu_custom_call.1} parent=1 // pred_check
      _
    $region15: #{tpu_custom_call.1} parent=1 // pred_check_branch
      %47 = sbr.rel (0) target = $region17
    $region16: #{tpu_custom_call.1} parent=1 // pred_region
      %s49 = ssub.s32 256, 256
      %50 = vsyncadd [#allocation9], %s49
      %s51 = sshll.u32 [#allocation8], 4
      %s52 = int_to_ptr.vmem [resolvable:$true] %s51
      %57 = dma.hbm_to_vmem [thread:$0]  %s3, 256, %s52, [#allocation9], 64, 64, 4
    $region17: #{tpu_custom_call.1} parent=1 // pred_fallthru
      _
    // Predicated region
    $region18: #{tpu_custom_call.1} parent=1 // pred_check
      _
    $region19: #{tpu_custom_call.1} parent=1 // pred_check_branch
      %59 = sbr.rel (0) target = $region21
    $region20: #{tpu_custom_call.1} parent=1 // pred_region
      %s61 = ssub.s32 16, 16
      %62 = vsyncadd [#allocation9], %s61
      %s64 = sshll.u32 [#allocation10], 4
      %s65 = int_to_ptr.vmem [resolvable:$true] %s64
      %67 = dma.hbm_to_vmem [thread:$0]  %s4, 16, %s65, [#allocation9]
    $region21: #{tpu_custom_call.1} parent=1 // pred_fallthru
      _
    // Predicated region
    $region22: #{tpu_custom_call.1} parent=1 // pred_check
      _
    $region23: #{tpu_custom_call.1} parent=1 // pred_check_branch
      %69 = sbr.rel (0) target = $region25
    $region24: #{tpu_custom_call.1} parent=1 // pred_region
      %70 = dma.done [#allocation3], 512
    $region25: #{tpu_custom_call.1} parent=1 // pred_fallthru
      _
    // Predicated region
    $region26: #{tpu_custom_call.1} parent=1 // pred_check
      _
    $region27: #{tpu_custom_call.1} parent=1 // pred_check_branch
      %72 = sbr.rel (0) target = $region29
    $region28: #{tpu_custom_call.1} parent=1 // pred_region
      %73 = dma.done [#allocation6], 16
    $region29: #{tpu_custom_call.1} parent=1 // pred_fallthru
      _
    // Predicated region
    $region30: #{tpu_custom_call.1} parent=1 // pred_check
      _
    $region31: #{tpu_custom_call.1} parent=1 // pred_check_branch
      %75 = sbr.rel (0) target = $region33
    $region32: #{tpu_custom_call.1} parent=1 // pred_region
      %76 = dma.done [#allocation6], 16
    $region33: #{tpu_custom_call.1} parent=1 // pred_fallthru
      _
    // Predicated region
    $region34: #{tpu_custom_call.1} parent=1 // pred_check
      _
    $region35: #{tpu_custom_call.1} parent=1 // pred_check_branch
      %78 = sbr.rel (0) target = $region37
    $region36: #{tpu_custom_call.1} parent=1 // pred_region
      %79 = dma.done [#allocation9], 256
    $region37: #{tpu_custom_call.1} parent=1 // pred_fallthru
      _
    // Predicated region
    $region38: #{tpu_custom_call.1} parent=1 // pred_check
      _
    $region39: #{tpu_custom_call.1} parent=1 // pred_check_branch
      %81 = sbr.rel (0) target = $region41
    $region40: #{tpu_custom_call.1} parent=1 // pred_region
      %82 = dma.done [#allocation9], 16
    $region41: #{tpu_custom_call.1} parent=1 // pred_fallthru
      _
    %v84 = vld [vmem:[#allocation2] sm:$0xff]
    %v85 = vld [vmem:[#allocation2 + $0x8] sm:$0xff]
    %v86 = vld [vmem:[#allocation2 + $0x10] sm:$0xff]
    %v87 = vld [vmem:[#allocation2 + $0x18] sm:$0xff]
    %v88 = vld [vmem:[#allocation5] sm:$0x1]
    %v89 = vld [vmem:[#allocation7] sm:$0x1]
    %vm90 = vcmask 261120
    %v91 = vsel %vm90, %v84, 0.0
    %92 = vadd.xlane.f32.xlu0 %v91
    %v93 = vpop.xlane.xlu0 %92
    %v94 = vsel %vm90, %v85, 0.0
    %95 = vadd.xlane.f32.xlu0 %v94
    %v96 = vpop.xlane.xlu0 %95
    %v97 = vsel %vm90, %v86, 0.0
    %98 = vadd.xlane.f32.xlu0 %v97
    %v99 = vpop.xlane.xlu0 %98
    %v100 = vsel %vm90, %v87, 0.0
    %101 = vadd.xlane.f32.xlu0 %v100
    %v102 = vpop.xlane.xlu0 %101
    %v103 = vrcp.pop 32.0
    %v104 = vmul.f32 %v93, %v103
    %v105 = vmul.f32 %v96, %v103
    %v106 = vmul.f32 %v99, %v103
    %v107 = vmul.f32 %v102, %v103
    %v108 = vsub.f32 %v84, %v104
    %v109 = vsub.f32 %v85, %v105
    %v110 = vsub.f32 %v86, %v106
    %v111 = vsub.f32 %v87, %v107
    %v112 = vmul.f32 %v108, %v108
    %v113 = vmul.f32 %v109, %v109
    %v114 = vmul.f32 %v110, %v110
    %v115 = vmul.f32 %v111, %v111
    %v116 = vsel %vm90, %v112, 0.0
    %117 = vadd.xlane.f32.xlu0 %v116
    %v118 = vpop.xlane.xlu0 %117
    %v119 = vsel %vm90, %v113, 0.0
    %120 = vadd.xlane.f32.xlu0 %v119
    %v121 = vpop.xlane.xlu0 %120
    %v122 = vsel %vm90, %v114, 0.0
    %123 = vadd.xlane.f32.xlu0 %v122
    %v124 = vpop.xlane.xlu0 %123
    %v125 = vsel %vm90, %v115, 0.0
    %126 = vadd.xlane.f32.xlu0 %v125
    %v127 = vpop.xlane.xlu0 %126
    %v128 = vmul.f32 %v118, %v103
    %v129 = vmul.f32 %v121, %v103
    %v130 = vmul.f32 %v124, %v103
    %v131 = vmul.f32 %v127, %v103
    %v132 = vadd.f32 %v128, 1e-05
    %v133 = vadd.f32 %v129, 1e-05
    %v134 = vadd.f32 %v130, 1e-05
    %v135 = vadd.f32 %v131, 1e-05
    %v136 = vrsqrt.pop %v132
    %v137 = vrsqrt.pop %v133
    %v138 = vrsqrt.pop %v134
    %v139 = vrsqrt.pop %v135
    %v140 = vmul.f32 %v108, %v136
    %v141 = vmul.f32 %v109, %v137
    %v142 = vmul.f32 %v110, %v138
    %v143 = vmul.f32 %v111, %v139
    %v145 = vlaneseq
    %v146 = vshrl.u32 %v145, 7
    %v147 = vsub.s32 0, %v146
    %v148 = vrot.slane %v88, %v147
    %v150 = vmul.f32 %v140, %v148
    %v151 = vmul.f32 %v141, %v148
    %v152 = vmul.f32 %v142, %v148
    %v153 = vmul.f32 %v143, %v148
    %v155 = vlaneseq
    %v156 = vshrl.u32 %v155, 7
    %v157 = vsub.s32 0, %v156
    %v158 = vrot.slane %v89, %v157
    %v160 = vadd.f32 %v150, %v158
    %v161 = vadd.f32 %v151, %v158
    %v162 = vadd.f32 %v152, %v158
    %v163 = vadd.f32 %v153, %v158
    %v164 = vpack.c.bf16 %v161, %v160
    %v165 = vpack.c.bf16 %v163, %v162
    %v166 = vld [vmem:[#allocation8] sm:$0xf]
    %v167 = vld [vmem:[#allocation8 + $0x4] sm:$0xf]
    %v168 = vld [vmem:[#allocation8 + $0x8] sm:$0xf]
    %v169 = vld [vmem:[#allocation8 + $0xc] sm:$0xf]
    %v170 = vld [vmem:[#allocation10] sm:$0x1]
    %v172 = vlaneseq
    %v173 = vshrl.u32 %v172, 7
    %v174 = vsub.s32 0, %v173
    %v175 = vrot.slane %v170, %v174
    %v181 = vunpack.c.l.b16 %v166
    %v182 = vunpack.c.l.b16 %v167
    %v183 = vunpack.c.l.b16 %v168
    %v184 = vunpack.c.l.b16 %v169
    %v185 = vpack.c.b16 %v182, %v181
    %v186 = vpack.c.b16 %v184, %v183
    %v190 = vsel %vm90, %v164, 0
    %v193 = vsel %vm90, %v165, 0
    %195 = vmatprep.subr.bf16.mxu0 0
    %196 = vmatpush1.bf16.msra.mxu0 %v185
    %197 = vmatprep.subr.bf16.mxu0 0
    %198 = vmatpush1.bf16.msra.mxu0 %v186
    %199 = vmatprep.subr.bf16.mxu0 0
    %200 = vmatpush1.bf16.msra.mxu0 0
    %201 = vmatprep.subr.bf16.mxu0 0
    %202 = vmatpush1.bf16.msra.mxu0 0
    %203 = vmatprep.subr.bf16.mxu0 0
    %204 = vmatpush1.bf16.msra.mxu0 0
    %205 = vmatprep.subr.bf16.mxu0 0
    %206 = vmatpush1.bf16.msra.mxu0 0
    %207 = vmatprep.subr.bf16.mxu0 0
    %208 = vmatpush1.bf16.msra.mxu0 0
    %209 = vmatprep.subr.bf16.mxu0 0
    %210 = vmatpush1.bf16.msra.mxu0 0
    %211 = vmatprep.subr.bf16.mxu0 0
    %212 = vmatpush1.bf16.msra.mxu0 0
    %213 = vmatprep.subr.bf16.mxu0 0
    %214 = vmatpush1.bf16.msra.mxu0 0
    %215 = vmatprep.subr.bf16.mxu0 0
    %216 = vmatpush1.bf16.msra.mxu0 0
    %217 = vmatprep.subr.bf16.mxu0 0
    %218 = vmatpush1.bf16.msra.mxu0 0
    %219 = vmatprep.subr.bf16.mxu0 0
    %220 = vmatpush1.bf16.msra.mxu0 0
    %221 = vmatprep.subr.bf16.mxu0 0
    %222 = vmatpush1.bf16.msra.mxu0 0
    %223 = vmatprep.subr.bf16.mxu0 0
    %224 = vmatpush1.bf16.msra.mxu0 0
    %225 = vmatprep.subr.bf16.mxu0 0
    %226 = vmatpush1.bf16.msra.mxu0 0
    %227 = vmatprep.mubr.bf16.mxu0 0
    %228 = vmatmul.mubr.bf16.gmra.mrb[0].mxu0 %v190
    %v229 = vpop.f32.mrb[0].mxu0
    %v230 = vadd.f32 %v175, %v229
    %v231 = vpop.f32.mrb[0].mxu0
    %v232 = vpop.f32.mrb[0].mxu0
    %v233 = vadd.f32 %v175, %v232
    %v234 = vpop.f32.mrb[0].mxu0
    %235 = vmatprep.mubr.bf16.mxu0 0
    %236 = vmatmul.mubr.bf16.gmra.mrb[0].mxu0 %v193
    %v237 = vpop.f32.mrb[0].mxu0
    %v238 = vadd.f32 %v175, %v237
    %v239 = vpop.f32.mrb[0].mxu0
    %v240 = vpop.f32.mrb[0].mxu0
    %v241 = vadd.f32 %v175, %v240
    %v242 = vpop.f32.mrb[0].mxu0
    %243 = vdwg.mxu0
    %v244 = vpack.c.bf16 %v233, %v230
    %v245 = vpack.c.bf16 %v241, %v238
    %v248 = vunpack.c.l.b16 %v244
    %v249 = vunpack.c.h.b16 %v244
    %v250 = vunpack.c.l.b16 %v245
    %v251 = vunpack.c.h.b16 %v245
    %v252 = vpack.c.b16 %v248, %v248
    %v253 = vpack.c.b16 %v249, %v249
    %v254 = vpack.c.b16 %v250, %v250
    %v255 = vpack.c.b16 %v251, %v251
    %vm260 = vcmask 781312
    %261 = vst.msk [vmem:[#allocation11] sm:$0xf] %vm260, %v252
    %262 = vst.msk [vmem:[#allocation11 + $0x4] sm:$0xf] %vm260, %v253
    %263 = vst.msk [vmem:[#allocation11 + $0x8] sm:$0xf] %vm260, %v254
    %264 = vst.msk [vmem:[#allocation11 + $0xc] sm:$0xf] %vm260, %v255
    // Predicated region
    $region42: #{tpu_custom_call.1} parent=1 // pred_check
      _
    $region43: #{tpu_custom_call.1} parent=1 // pred_check_branch
      %266 = sbr.rel (0) target = $region45
    $region44: #{tpu_custom_call.1} parent=1 // pred_region
      %s268 = ssub.s32 256, 256
      %269 = vsyncadd [#allocation4], %s268
      %s270 = sshll.u32 [#allocation11], 4
      %s271 = int_to_ptr.vmem [resolvable:$true] %s270
      %276 = dma.vmem_to_hbm [thread:$0]  %s271, 256, %s5, [#allocation4], 64, 64, 4
    $region45: #{tpu_custom_call.1} parent=1 // pred_fallthru
      _
    // Predicated region
    $region46: #{tpu_custom_call.1} parent=1 // pred_check
      _
    $region47: #{tpu_custom_call.1} parent=1 // pred_check_branch
      %278 = sbr.rel (0) target = $region49
    $region48: #{tpu_custom_call.1} parent=1 // pred_region
      %279 = dma.done [#allocation4], 256
    $region49: #{tpu_custom_call.1} parent=1 // pred_fallthru
      _
    %280 = vsyncpa [#allocation3], 1
    %281 = vsyncpa [#allocation6], 1
    %282 = vsyncpa [#allocation9], 1
    %283 = vsyncpa [#allocation4], 1

</llo_original>
